<compile_context>
chip_gen: v7x
topology: tpu7x:2x2x1
jax: 0.10.0
libtpu: 0.0.40
codegen_flags: <defaults>
</compile_context>

<pallas_src>
import functools

import jax
import jax.numpy as jnp
from jax.experimental import pallas as pl
from jax.experimental.pallas import tpu as pltpu


def _std_partial_kernel(preds_ref, labels_ref, out_ref, acc_sum, acc_sq, *,
                        block_rows, blocks_per_chunk, total_rows):
    """Per-chunk streaming accumulation of sum / sum-of-squares of
    |preds - labels| into (8, 128) VMEM vector accumulators."""
    j = pl.program_id(1)

    @pl.when(j == 0)
    def _init():
        acc_sum[...] = jnp.zeros_like(acc_sum)
        acc_sq[...] = jnp.zeros_like(acc_sq)

    # Cast happens in-kernel; inputs stream in their native dtype.
    err = jnp.abs(preds_ref[...].astype(jnp.float32)
                  - labels_ref[...].astype(jnp.float32))

    # Mask rows past the end of the flattened input: handles the partial last
    # block and any clamped/duplicated block index.  Cheap VPU compare+select
    # in a memory-bound kernel.
    global_block = pl.program_id(0) * blocks_per_chunk + j
    row_start = global_block * block_rows
    row_ids = row_start + jax.lax.broadcasted_iota(
        jnp.int32, (block_rows, 128), 0)
    err = jnp.where(row_ids < total_rows, err, 0.0)

    # Fold the (block_rows, 128) tile into the (8, 128) accumulators: pure
    # vreg-wise adds on the VPU, no cross-lane (XLU) work in the hot loop.
    part = err.reshape(block_rows // 8, 8, 128)
    acc_sum[...] += part.sum(axis=0)
    acc_sq[...] += (part * part).sum(axis=0)

    @pl.when(j == pl.num_programs(1) - 1)
    def _finalize():
        out_ref[0, 0, :, :] = acc_sum[...]
        out_ref[0, 1, :, :] = acc_sq[...]


def pallas_std(preds, labels, *, block_rows=2048, num_chunks=2):
    """Population std (np.std, ddof=0) of |preds - labels| over all elements."""
    assert preds.shape == labels.shape
    n = preds.size
    lanes = 128

    p = preds.reshape(-1)   # bitcast reshape, no dtype cast, no copy
    l = labels.reshape(-1)

    rows = pl.cdiv(n, lanes)
    pad = rows * lanes - n
    if pad:
        # Only when numel is not a multiple of 128: pad the tail with zeros
        # (|0 - 0| = 0 contributes nothing).  The common aligned case is
        # zero-copy.
        p = jnp.pad(p, (0, pad))
        l = jnp.pad(l, (0, pad))

    p2 = p.reshape(rows, lanes)
    l2 = l.reshape(rows, lanes)

    # Block rows: multiple of 8, capped for small inputs.
    br = min(block_rows, ((rows + 7) // 8) * 8)
    br = max(8, (br // 8) * 8)

    total_blocks = pl.cdiv(rows, br)
    nchunks = max(1, min(num_chunks, total_blocks))
    bpc = pl.cdiv(total_blocks, nchunks)   # blocks per chunk

    if total_blocks % nchunks == 0:
        def in_map(ci, bi):
            return (ci * bpc + bi, 0)
    else:
        def in_map(ci, bi):
            # Uneven split: clamp to the last valid block; the in-kernel row
            # mask zeroes its contribution.
            return (jnp.minimum(ci * bpc + bi, total_blocks - 1), 0)

    kernel = functools.partial(
        _std_partial_kernel,
        block_rows=br, blocks_per_chunk=bpc, total_rows=rows)

    partials = pl.pallas_call(
        kernel,
        out_shape=jax.ShapeDtypeStruct((nchunks, 2, 8, 128), jnp.float32),
        grid_spec=pltpu.PrefetchScalarGridSpec(
            num_scalar_prefetch=0,
            grid=(nchunks, bpc),
            in_specs=[
                pl.BlockSpec((br, lanes), in_map),
                pl.BlockSpec((br, lanes), in_map),
            ],
            out_specs=pl.BlockSpec((1, 2, 8, 128),
                                   lambda ci, bi: (ci, 0, 0, 0)),
            scratch_shapes=[
                pltpu.VMEM((8, 128), jnp.float32),  # per-lane running sum
                pltpu.VMEM((8, 128), jnp.float32),  # per-lane running sum sq
            ],
        ),
        compiler_params=pltpu.CompilerParams(
            dimension_semantics=("parallel", "arbitrary"),
            vmem_limit_bytes=32 * 1024 * 1024,
        ),
    )(p2, l2)

    # Tiny final cross-lane reduction + std on the wrapper side.
    total_sum = jnp.sum(partials[:, 0])
    total_sq = jnp.sum(partials[:, 1])
    inv_n = jnp.float32(1.0 / n)
    mean = total_sum * inv_n
    var = total_sq * inv_n - mean * mean
    # TODO(synk): E[x^2]-E[x]^2 can cancel for distributions with mean >> std;
    # a two-pass / Welford variant would be more robust at extra HBM cost.
    return jnp.sqrt(jnp.maximum(var, jnp.float32(0.0)))


if __name__ == "__main__":
    key = jax.random.PRNGKey(0)
    k1, k2 = jax.random.split(key)

    # Small NCHW-like shapes consistent with a dense-prediction loss metric.
    preds = jax.random.normal(k1, (2, 4, 16, 16), dtype=jnp.float32)
    labels = jax.random.normal(k2, (2, 4, 16, 16), dtype=jnp.float32)

    result = pallas_std(preds, labels)
    result = jax.block_until_ready(result)

    # Reference: population std (np.std default, ddof=0) of |preds - labels|.
    err = jnp.abs(preds - labels).astype(jnp.float32)
    ref = jnp.sqrt(jnp.mean((err - jnp.mean(err)) ** 2))

    assert result.shape == (), f"expected scalar, got {result.shape}"
    assert jnp.allclose(result, ref, rtol=1e-5, atol=1e-6), (result, ref)

    print("KERNEL_OK")
</pallas_src>

<mosaic_0001>
module attributes {stable_mosaic.version = 11 : i64} {
  func.func @_std_partial_kernel(%arg0: i32, %arg1: i32, %arg2: memref<16x128xf32, #tpu.memory_space<vmem>>, %arg3: memref<16x128xf32, #tpu.memory_space<vmem>>, %arg4: memref<1x2x8x128xf32, #tpu.memory_space<vmem>>, %arg5: memref<8x128xf32, #tpu.memory_space<vmem>>, %arg6: memref<8x128xf32, #tpu.memory_space<vmem>>) attributes {dimension_semantics = [#tpu.dimension_semantics<parallel>, #tpu.dimension_semantics<arbitrary>], iteration_bounds = array<i64: 1, 1>, scalar_prefetch = 0 : i64, scratch_operands = 2 : i64, tpu.core_type = #tpu.core_type<tc>, window_params = [{transform_indices = @transform_0, window_bounds = array<i64: 16, 128>}, {transform_indices = @transform_1, window_bounds = array<i64: 16, 128>}, {transform_indices = @transform_2, window_bounds = array<i64: 1, 2, 8, 128>}]} {
    %c0_i32 = arith.constant 0 : i32
    %0 = arith.cmpi eq, %arg1, %c0_i32 : i32
    %1 = arith.extui %0 : i1 to i32
    %c0_i32_0 = arith.constant 0 : i32
    %2 = arith.cmpi ne, %1, %c0_i32_0 : i32
    scf.if %2 {
      %cst_17 = arith.constant 0.000000e+00 : f32
      %30 = vector.broadcast %cst_17 : f32 to vector<8x128xf32>
      %c0_18 = arith.constant 0 : index
      %c0_19 = arith.constant 0 : index
      %31 = vector.load %arg5[%c0_18, %c0_19] : memref<8x128xf32, #tpu.memory_space<vmem>>, vector<8x128xf32>
      tpu.vector_store %arg5[%c0_18, %c0_19], %30 {strides = array<i32>} : memref<8x128xf32, #tpu.memory_space<vmem>>, vector<8x128xf32>,
      %cst_20 = arith.constant 0.000000e+00 : f32
      %32 = vector.broadcast %cst_20 : f32 to vector<8x128xf32>
      %c0_21 = arith.constant 0 : index
      %c0_22 = arith.constant 0 : index
      %33 = vector.load %arg6[%c0_21, %c0_22] : memref<8x128xf32, #tpu.memory_space<vmem>>, vector<8x128xf32>
      tpu.vector_store %arg6[%c0_21, %c0_22], %32 {strides = array<i32>} : memref<8x128xf32, #tpu.memory_space<vmem>>, vector<8x128xf32>,
    } else {
    }
    %c0 = arith.constant 0 : index
    %c0_1 = arith.constant 0 : index
    %3 = vector.load %arg2[%c0, %c0_1] : memref<16x128xf32, #tpu.memory_space<vmem>>, vector<16x128xf32>
    %c0_2 = arith.constant 0 : index
    %c0_3 = arith.constant 0 : index
    %4 = vector.load %arg3[%c0_2, %c0_3] : memref<16x128xf32, #tpu.memory_space<vmem>>, vector<16x128xf32>
    %5 = arith.subf %3, %4 : vector<16x128xf32>
    %6 = math.absf %5 : vector<16x128xf32>
    %c1_i32 = arith.constant 1 : i32
    %7 = arith.muli %arg0, %c1_i32 : i32
    %8 = arith.addi %7, %arg1 : i32
    %c16_i32 = arith.constant 16 : i32
    %9 = arith.muli %8, %c16_i32 : i32
    %10 = tpu.iota {dimensions = array<i32: 0>} : vector<16x128xi32>
    %11 = vector.broadcast %9 : i32 to vector<16x128xi32>
    %12 = arith.addi %11, %10 : vector<16x128xi32>
    %c16_i32_4 = arith.constant 16 : i32
    %13 = vector.broadcast %c16_i32_4 : i32 to vector<16x128xi32>
    %14 = arith.cmpi slt, %12, %13 : vector<16x128xi32>
    %cst = arith.constant 0.000000e+00 : f32
    %15 = vector.broadcast %cst : f32 to vector<16x128xf32>
    %16 = arith.select %14, %6, %15 : vector<16x128xi1>, vector<16x128xf32>
    %17 = vector.shape_cast %16 : vector<16x128xf32> to vector<2x8x128xf32>
    %c0_5 = arith.constant 0 : index
    %c0_6 = arith.constant 0 : index
    %18 = vector.load %arg5[%c0_5, %c0_6] : memref<8x128xf32, #tpu.memory_space<vmem>>, vector<8x128xf32>
    %cst_7 = arith.constant dense<0.000000e+00> : vector<8x128xf32>
    %19 = vector.multi_reduction <add>, %17, %cst_7 [0] : vector<2x8x128xf32> to vector<8x128xf32>
    %20 = arith.addf %18, %19 : vector<8x128xf32>
    %c0_8 = arith.constant 0 : index
    %c0_9 = arith.constant 0 : index
    %21 = vector.load %arg5[%c0_8, %c0_9] : memref<8x128xf32, #tpu.memory_space<vmem>>, vector<8x128xf32>
    tpu.vector_store %arg5[%c0_8, %c0_9], %20 {strides = array<i32>} : memref<8x128xf32, #tpu.memory_space<vmem>>, vector<8x128xf32>,
    %c0_10 = arith.constant 0 : index
    %c0_11 = arith.constant 0 : index
    %22 = vector.load %arg6[%c0_10, %c0_11] : memref<8x128xf32, #tpu.memory_space<vmem>>, vector<8x128xf32>
    %23 = arith.mulf %17, %17 : vector<2x8x128xf32>
    %cst_12 = arith.constant dense<0.000000e+00> : vector<8x128xf32>
    %24 = vector.multi_reduction <add>, %23, %cst_12 [0] : vector<2x8x128xf32> to vector<8x128xf32>
    %25 = arith.addf %22, %24 : vector<8x128xf32>
    %c0_13 = arith.constant 0 : index
    %c0_14 = arith.constant 0 : index
    %26 = vector.load %arg6[%c0_13, %c0_14] : memref<8x128xf32, #tpu.memory_space<vmem>>, vector<8x128xf32>
    tpu.vector_store %arg6[%c0_13, %c0_14], %25 {strides = array<i32>} : memref<8x128xf32, #tpu.memory_space<vmem>>, vector<8x128xf32>,
    %c0_i32_15 = arith.constant 0 : i32
    %27 = arith.cmpi eq, %arg1, %c0_i32_15 : i32
    %28 = arith.extui %27 : i1 to i32
    %c0_i32_16 = arith.constant 0 : i32
    %29 = arith.cmpi ne, %28, %c0_i32_16 : i32
    scf.if %29 {
      %c0_17 = arith.constant 0 : index
      %c0_18 = arith.constant 0 : index
      %30 = vector.load %arg5[%c0_17, %c0_18] : memref<8x128xf32, #tpu.memory_space<vmem>>, vector<8x128xf32>
      %c0_19 = arith.constant 0 : index
      %c0_20 = arith.constant 0 : index
      %c0_21 = arith.constant 0 : index
      %c0_22 = arith.constant 0 : index
      %31 = vector.load %arg4[%c0_19, %c0_20, %c0_21, %c0_22] : memref<1x2x8x128xf32, #tpu.memory_space<vmem>>, vector<1x1x8x128xf32>
      %32 = vector.shape_cast %31 : vector<1x1x8x128xf32> to vector<8x128xf32>
      %33 = vector.shape_cast %30 : vector<8x128xf32> to vector<1x1x8x128xf32>
      tpu.vector_store %arg4[%c0_19, %c0_20, %c0_21, %c0_22], %33 {strides = array<i32>} : memref<1x2x8x128xf32, #tpu.memory_space<vmem>>, vector<1x1x8x128xf32>,
      %c0_23 = arith.constant 0 : index
      %c0_24 = arith.constant 0 : index
      %34 = vector.load %arg6[%c0_23, %c0_24] : memref<8x128xf32, #tpu.memory_space<vmem>>, vector<8x128xf32>
      %c0_25 = arith.constant 0 : index
      %c1 = arith.constant 1 : index
      %c0_26 = arith.constant 0 : index
      %c0_27 = arith.constant 0 : index
      %35 = vector.load %arg4[%c0_25, %c1, %c0_26, %c0_27] : memref<1x2x8x128xf32, #tpu.memory_space<vmem>>, vector<1x1x8x128xf32>
      %36 = vector.shape_cast %35 : vector<1x1x8x128xf32> to vector<8x128xf32>
      %37 = vector.shape_cast %34 : vector<8x128xf32> to vector<1x1x8x128xf32>
      tpu.vector_store %arg4[%c0_25, %c1, %c0_26, %c0_27], %37 {strides = array<i32>} : memref<1x2x8x128xf32, #tpu.memory_space<vmem>>, vector<1x1x8x128xf32>,
    } else {
    }
    return
  }
  func.func @transform_0(%arg0: i32, %arg1: i32) -> (i32, i32) {
    %c1_i32 = arith.constant 1 : i32
    %0 = arith.muli %arg0, %c1_i32 : i32
    %1 = arith.addi %0, %arg1 : i32
    %c0_i32 = arith.constant 0 : i32
    %c0_i32_0 = arith.constant 0 : i32
    return %1, %c0_i32 : i32, i32
  }
  func.func @transform_1(%arg0: i32, %arg1: i32) -> (i32, i32) {
    %c1_i32 = arith.constant 1 : i32
    %0 = arith.muli %arg0, %c1_i32 : i32
    %1 = arith.addi %0, %arg1 : i32
    %c0_i32 = arith.constant 0 : i32
    %c0_i32_0 = arith.constant 0 : i32
    return %1, %c0_i32 : i32, i32
  }
  func.func @transform_2(%arg0: i32, %arg1: i32) -> (i32, i32, i32, i32) {
    %c0_i32 = arith.constant 0 : i32
    %c0_i32_0 = arith.constant 0 : i32
    %c0_i32_1 = arith.constant 0 : i32
    %c0_i32_2 = arith.constant 0 : i32
    return %arg0, %c0_i32, %c0_i32_0, %c0_i32_1 : i32, i32, i32, i32
  }
}

</mosaic_0001>

<llo_original>
// kernel: tpu_custom_call.1
$region0: #{tpu_custom_call.1}
  #allocation0 [shape = 'u32[]', space=smem, size = 0x4, offset = 0x4, fixed_abs, tag = 'smem constant byte address 0x4 - core index']
  #allocation1 [shape = 'u32[144,128]{1,0:T(1,128)}', space=vmem, size = 0x12000, scoped, tag = 'internal scratch']
  #allocation2 [shape = 'f32[8,128]{1,0:T(8,128)}', space=vmem, size = 0x1000, scoped, tag = 'scratch operand']
  #allocation3 [shape = 'f32[8,128]{1,0:T(8,128)}', space=vmem, size = 0x1000, scoped, tag = 'scratch operand']
  %s0 = inlined_call_operand.hbm [shape: f32[16,128], index: 0, kind: input, shape index: {}]
  %s1 = inlined_call_operand.hbm [shape: f32[16,128], index: 1, kind: input, shape index: {}]
  %s2 = inlined_call_operand.hbm [shape: f32[1,2,8,128], index: 2, kind: output, shape index: {}]
  %s3 = sld [smem:[#allocation0]]
  $region34: #{tpu_custom_call.1} parent=0
    _
  %s5 = ssub.s32 1, %s3
  %s6 = scalar_select 0, %s5, %s3
  $region1: #{tpu_custom_call.1} parent=0
    #allocation4 [shape = 'u8[8192]{0}', space=vmem, size = 0x2000, scoped, tag = 'input window, operand 0, single buffered']
    #allocation5 [shape = 's32[1]{0}', space=sflag, size = 0x4, scoped, tag = 'scoped memory for tpu_custom_call.1']
    #allocation6 [shape = 's32[1]{0}', space=sflag, size = 0x4, scoped, tag = 'scoped memory for tpu_custom_call.1']
    #allocation7 [shape = 'u8[8192]{0}', space=vmem, size = 0x2000, scoped, tag = 'input window, operand 1, single buffered']
    #allocation8 [shape = 's32[1]{0}', space=sflag, size = 0x4, scoped, tag = 'scoped memory for tpu_custom_call.1']
    #allocation9 [shape = 'u8[8192]{0}', space=vmem, size = 0x2000, scoped, tag = 'output window, operand 0, single buffered']
    %7 = vsyncpa [#allocation5], 0
    %8 = vsyncpa [#allocation8], 0
    %9 = vsyncpa [#allocation6], 0
    // Predicated region
    $region2: #{tpu_custom_call.1} parent=1 // pred_check
      _
    $region3: #{tpu_custom_call.1} parent=1 // pred_check_branch
      %11 = sbr.rel (0) target = $region5
    $region4: #{tpu_custom_call.1} parent=1 // pred_region
      %s12 = sadd.s32 0, 0
      %s13 = smul.u32 2, %s12
      %s15 = ssub.s32 256, 256
      %16 = vsyncadd [#allocation5], %s15
      %s17 = smul.addr %s13, 128
      %s18 = scalar_lea.hbm %s0, %s17
      %s19 = sshll.u32 [#allocation4], 4
      %s20 = int_to_ptr.vmem [resolvable:$true] %s19
      %25 = dma.hbm_to_vmem [thread:$0]  %s18, 256, %s20, [#allocation5], 128, 128, 8
    $region5: #{tpu_custom_call.1} parent=1 // pred_fallthru
      _
    // Predicated region
    $region6: #{tpu_custom_call.1} parent=1 // pred_check
      _
    $region7: #{tpu_custom_call.1} parent=1 // pred_check_branch
      %27 = sbr.rel (0) target = $region9
    $region8: #{tpu_custom_call.1} parent=1 // pred_region
      %s28 = sadd.s32 0, 0
      %s29 = smul.u32 2, %s28
      %s31 = ssub.s32 256, 256
      %32 = vsyncadd [#allocation8], %s31
      %s33 = smul.addr %s29, 128
      %s34 = scalar_lea.hbm %s1, %s33
      %s35 = sshll.u32 [#allocation7], 4
      %s36 = int_to_ptr.vmem [resolvable:$true] %s35
      %41 = dma.hbm_to_vmem [thread:$0]  %s34, 256, %s36, [#allocation8], 128, 128, 8
    $region9: #{tpu_custom_call.1} parent=1 // pred_fallthru
      _
    // Predicated region
    $region10: #{tpu_custom_call.1} parent=1 // pred_check
      _
    $region11: #{tpu_custom_call.1} parent=1 // pred_check_branch
      %43 = sbr.rel (0) target = $region13
    $region12: #{tpu_custom_call.1} parent=1 // pred_region
      %44 = dma.done [#allocation5], 256
    $region13: #{tpu_custom_call.1} parent=1 // pred_fallthru
      _
    // Predicated region
    $region14: #{tpu_custom_call.1} parent=1 // pred_check
      _
    $region15: #{tpu_custom_call.1} parent=1 // pred_check_branch
      %46 = sbr.rel (0) target = $region17
    $region16: #{tpu_custom_call.1} parent=1 // pred_region
      %47 = dma.done [#allocation8], 256
    $region17: #{tpu_custom_call.1} parent=1 // pred_fallthru
      _
    %s48 = sadd.s32 0, 0
    %s49 = smul.u32 2, %s48
    %s50 = sadd.s32 0, 0
    %s51 = smul.u32 2, %s50
    %p52 = scmp.eq.s32.totalorder 0, 0
    // Predicated region
    $region18: #{tpu_custom_call.1} parent=1 // pred_check
      %p53 = pneg %p52
    $region19: #{tpu_custom_call.1} parent=1 // pred_check_branch
      %55 = sbr.rel (%p53) target = $region21
    $region20: #{tpu_custom_call.1} parent=1 // pred_region
      %56 = vst [vmem:[#allocation2] sm:$0xff] 0.0
      %57 = vst [vmem:[#allocation3] sm:$0xff] 0.0
    $region21: #{tpu_custom_call.1} parent=1 // pred_fallthru
      _
    %v58 = vld [vmem:[#allocation4] sm:$0xff]
    %v59 = vld [vmem:[#allocation4 + $0x8] sm:$0xff]
    %v60 = vld [vmem:[#allocation7] sm:$0xff]
    %v61 = vld [vmem:[#allocation7 + $0x8] sm:$0xff]
    %v62 = vsub.f32 %v58, %v60
    %v63 = vsub.f32 %v59, %v61
    %v64 = vand.u32 2147483647, %v62
    %v65 = vand.u32 2147483647, %v63
    %s66 = sadd.s32 0, 0
    %s67 = smul.u32 %s66, 16
    %v68 = vlaneseq
    %v69 = vshrl.u32 %v68, 7
    %v70 = vadd.s32 %v69, 8
    %v71 = vstv %s67
    %v72 = vadd.s32 %v71, %v69
    %v73 = vadd.s32 %v71, %v70
    %vm74 = vcmp.lt.s32.totalorder %v72, 16
    %vm75 = vcmp.lt.s32.totalorder %v73, 16
    %v76 = vsel %vm74, %v64, 0.0
    %v77 = vsel %vm75, %v65, 0.0
    %v78 = vld [vmem:[#allocation2] sm:$0xff]
    %v79 = vadd.f32 %v76, %v77
    %v80 = vadd.f32 %v78, %v79
    %81 = vst [vmem:[#allocation2] sm:$0xff] %v80
    %v82 = vld [vmem:[#allocation3] sm:$0xff]
    %v83 = vmul.f32 %v76, %v76
    %v84 = vmul.f32 %v77, %v77
    %v85 = vadd.f32 %v83, %v84
    %v86 = vadd.f32 %v82, %v85
    %87 = vst [vmem:[#allocation3] sm:$0xff] %v86
    // Predicated region
    $region22: #{tpu_custom_call.1} parent=1 // pred_check
      %p88 = pneg %p52
    $region23: #{tpu_custom_call.1} parent=1 // pred_check_branch
      %90 = sbr.rel (%p88) target = $region25
    $region24: #{tpu_custom_call.1} parent=1 // pred_region
      %v91 = vld [vmem:[#allocation2] sm:$0xff]
      %92 = vst [vmem:[#allocation9] sm:$0xff] %v91
      %v93 = vld [vmem:[#allocation3] sm:$0xff]
      %s94 = scalar_lea.vmem [#allocation9], 8
      %95 = vst [vmem:[%s94] sm:$0xff] %v93
    $region25: #{tpu_custom_call.1} parent=1 // pred_fallthru
      _
    // Predicated region
    $region26: #{tpu_custom_call.1} parent=1 // pred_check
      _
    $region27: #{tpu_custom_call.1} parent=1 // pred_check_branch
      %97 = sbr.rel (0) target = $region29
    $region28: #{tpu_custom_call.1} parent=1 // pred_region
      %s99 = ssub.s32 256, 256
      %100 = vsyncadd [#allocation6], %s99
      %s101 = sshll.u32 [#allocation9], 4
      %s102 = int_to_ptr.vmem [resolvable:$true] %s101
      %107 = dma.vmem_to_hbm [thread:$0]  %s102, 256, %s2, [#allocation6], 128, 128, 8
    $region29: #{tpu_custom_call.1} parent=1 // pred_fallthru
      _
    // Predicated region
    $region30: #{tpu_custom_call.1} parent=1 // pred_check
      _
    $region31: #{tpu_custom_call.1} parent=1 // pred_check_branch
      %109 = sbr.rel (0) target = $region33
    $region32: #{tpu_custom_call.1} parent=1 // pred_region
      %110 = dma.done [#allocation6], 256
    $region33: #{tpu_custom_call.1} parent=1 // pred_fallthru
      _
    %111 = vsyncpa [#allocation5], 1
    %112 = vsyncpa [#allocation8], 1
    %113 = vsyncpa [#allocation6], 1

</llo_original>
